<compile_context>
chip_gen: v6e
topology: v6e:2x2x1
jax: 0.10.0
libtpu: 0.0.40
codegen_flags: <defaults>
</compile_context>

<pallas_src>
import jax
import jax.numpy as jnp
from jax.experimental import pallas as pl
from jax.experimental.pallas import tpu as pltpu


def patch_embed_kernel(xp_ref, w_ref, add_ref, o_ref):
    # xp_ref : (bm, n, P)   patch rows for bm images (compute dtype, e.g. bf16)
    # w_ref  : (P, E)       projection weight, pre-transposed (compute dtype)
    # add_ref: (np1, E) f32 fused addend: row0 = cls+pos[0]; rows 1..n = bias+pos[1:]
    # o_ref  : (bm, np1, E) output slab for this batch block
    bm, n, P = xp_ref.shape
    E = w_ref.shape[1]

    w = w_ref[...]
    if n % 8 == 0:
        # Layout-free merge of (bm, n) -> bm*n (n is a multiple of the sublane
        # count), one large MXU matmul with f32 accumulation.
        x2d = xp_ref[...].reshape(bm * n, P)
        y = jnp.dot(x2d, w, preferred_element_type=jnp.float32).reshape(bm, n, E)
    else:
        # Static per-image unroll (bm is a Python int).
        y = jnp.stack(
            [jnp.dot(xp_ref[i], w, preferred_element_type=jnp.float32)
             for i in range(bm)],
            axis=0)

    addend = add_ref[...]                                   # (np1, E) f32
    # Row 0 of every image: cls_token + pos[0] (no matmul involved).
    o_ref[:, 0:1, :] = jnp.broadcast_to(
        addend[0:1, :][None], (bm, 1, E)).astype(o_ref.dtype)
    # Rows 1..n: patches @ W^T + bias + pos[1:]
    o_ref[:, 1:, :] = (y + addend[1:, :][None]).astype(o_ref.dtype)


def _pick_block_b(B, max_bm=8):
    """Largest divisor of B that is <= max_bm while keeping >= 2 grid steps."""
    best = 1
    for bm in range(1, min(B, max_bm) + 1):
        if B % bm == 0 and (B == 1 or B // bm >= 2):
            best = bm
    return best


def patch_embedding(x, weight, bias, cls_token, pos_embedding, *, patch_size,
                    compute_dtype=jnp.bfloat16, block_b=None):
    """Forward of PatchEmbedding.

    x:             [B, C, H, W] float32
    weight:        [emb, patch_dim]  (PyTorch nn.Linear layout, patch_dim = C*s1*s2)
    bias:          [emb]
    cls_token:     [1, 1, emb]
    pos_embedding: [1, num_patches+1, emb]
    returns        [B, num_patches+1, emb]
    """
    B, C, H, W = x.shape
    s1, s2 = (patch_size if isinstance(patch_size, tuple)
              else (patch_size, patch_size))
    assert H % s1 == 0 and W % s2 == 0
    hh, ww = H // s1, W // s2
    n = hh * ww
    P = C * s1 * s2
    E = weight.shape[0]
    np1 = n + 1
    assert weight.shape == (E, P)
    assert bias.shape == (E,)
    assert cls_token.shape == (1, 1, E)
    assert pos_embedding.shape == (1, np1, E)
    assert E % 128 == 0, "emb_size must be a multiple of 128 (lane-dense stores)"

    if block_b is None:
        block_b = _pick_block_b(B)
    assert B % block_b == 0
    grid_b = B // block_b

    # einops 'b c (h s1) (w s2) -> b (h w) (s1 s2 c)'  (layout only) + bf16 cast.
    patches = (x.reshape(B, C, hh, s1, ww, s2)
                .transpose(0, 2, 4, 3, 5, 1)
                .reshape(B, n, P)).astype(compute_dtype)

    # One-time transpose + cast: (E, P) -> (P, E) in compute dtype.
    wt = weight.T.astype(compute_dtype)

    # Fused epilogue addend (np1, E) f32:
    #   row 0      = cls_token + pos[0]
    #   rows 1..n  = bias + pos[1:]
    addend = (pos_embedding.reshape(np1, E).astype(jnp.float32)
              + jnp.concatenate(
                  [cls_token.reshape(1, E).astype(jnp.float32),
                   jnp.broadcast_to(bias.reshape(1, E).astype(jnp.float32),
                                    (n, E))],
                  axis=0))

    cbytes = jnp.dtype(compute_dtype).itemsize
    obytes = jnp.dtype(x.dtype).itemsize
    flops = 2 * B * n * P * E
    bytes_accessed = (patches.size * cbytes + wt.size * cbytes
                      + addend.size * 4 + B * np1 * E * obytes)

    # Explicit VMEM budget: double-buffered per-step slabs + (conservatively
    # double-counted) resident operands, with margin.  Capped well under the
    # smallest physical VMEM (v7x 64 MiB).
    vmem_need = (2 * block_b * n * P * cbytes
                 + 2 * block_b * np1 * E * obytes
                 + 2 * P * E * cbytes
                 + 2 * np1 * E * 4)
    vmem_limit = int(min(60 * 1024 * 1024,
                         max(2 * vmem_need + (4 << 20), 16 * 1024 * 1024)))

    out = pl.pallas_call(
        patch_embed_kernel,
        out_shape=jax.ShapeDtypeStruct((B, np1, E), x.dtype),
        grid_spec=pltpu.PrefetchScalarGridSpec(
            num_scalar_prefetch=0,
            grid=(grid_b,),
            in_specs=[
                pl.BlockSpec((block_b, n, P), lambda i: (i, 0, 0)),  # patches
                pl.BlockSpec((P, E), lambda i: (0, 0)),              # weight^T, resident
                pl.BlockSpec((np1, E), lambda i: (0, 0)),            # fused addend, resident
            ],
            out_specs=pl.BlockSpec((block_b, np1, E), lambda i: (i, 0, 0)),
        ),
        compiler_params=pltpu.CompilerParams(
            dimension_semantics=("parallel",),
            vmem_limit_bytes=vmem_limit,
        ),
        cost_estimate=pl.CostEstimate(
            flops=flops, transcendentals=0, bytes_accessed=bytes_accessed),
    )(patches, wt, addend)

    return out


if __name__ == "__main__":
    # Small, module-consistent shapes: 16x16 image, 4x4 patches, 3 channels,
    # emb_size=128 (multiple of 128 -> lane-dense output stores).
    B, C, IMG, PATCH, EMB = 2, 3, 16, 4, 128
    n_patches = (IMG // PATCH) ** 2            # 16
    patch_dim = C * PATCH * PATCH              # 48

    key = jax.random.PRNGKey(0)
    kx, kw, kb, kc, kp = jax.random.split(key, 5)
    x = jax.random.normal(kx, (B, C, IMG, IMG), dtype=jnp.float32)
    weight = jax.random.normal(kw, (EMB, patch_dim), dtype=jnp.float32) * 0.05
    bias = jax.random.normal(kb, (EMB,), dtype=jnp.float32) * 0.05
    cls_token = jax.random.normal(kc, (1, 1, EMB), dtype=jnp.float32)
    pos_embedding = jax.random.normal(kp, (1, n_patches + 1, EMB),
                                      dtype=jnp.float32)

    out = patch_embedding(x, weight, bias, cls_token, pos_embedding,
                          patch_size=PATCH)
    out = jax.block_until_ready(out)

    # Pure-JAX references of the PyTorch forward.
    hh = ww = IMG // PATCH
    patches_ref = (x.reshape(B, C, hh, PATCH, ww, PATCH)
                    .transpose(0, 2, 4, 3, 5, 1)
                    .reshape(B, n_patches, patch_dim))
    cls_b = jnp.broadcast_to(cls_token, (B, 1, EMB))

    # (a) bf16-matched reference (same input rounding / f32 accumulation as kernel)
    proj_bf16 = jnp.einsum("bnp,pe->bne",
                           patches_ref.astype(jnp.bfloat16),
                           weight.T.astype(jnp.bfloat16),
                           preferred_element_type=jnp.float32) + bias
    ref_bf16 = jnp.concatenate([cls_b, proj_bf16], axis=1) + pos_embedding

    # (b) full-f32 semantic reference (exact PyTorch forward semantics)
    proj_f32 = jnp.einsum("bnp,ep->bne", patches_ref, weight) + bias
    ref_f32 = jnp.concatenate([cls_b, proj_f32], axis=1) + pos_embedding

    assert out.shape == (B, n_patches + 1, EMB) and out.dtype == x.dtype
    assert jnp.allclose(out, ref_bf16, atol=2e-3, rtol=2e-3), \
        "mismatch vs bf16-matched reference"
    assert jnp.allclose(out, ref_f32, atol=3e-2, rtol=3e-2), \
        "mismatch vs f32 reference (beyond bf16 tolerance)"
    print("KERNEL_OK")
</pallas_src>

<mosaic_0001>
module attributes {stable_mosaic.version = 11 : i64} {
  func.func @patch_embed_kernel(%arg0: i32, %arg1: memref<1x16x48xbf16, #tpu.memory_space<vmem>>, %arg2: memref<48x128xbf16, #tpu.memory_space<vmem>>, %arg3: memref<17x128xf32, #tpu.memory_space<vmem>>, %arg4: memref<1x17x128xf32, #tpu.memory_space<vmem>>) attributes {dimension_semantics = [#tpu.dimension_semantics<parallel>], iteration_bounds = array<i64: 2>, scalar_prefetch = 0 : i64, scratch_operands = 0 : i64, tpu.core_type = #tpu.core_type<tc>, window_params = [{transform_indices = @transform_0, window_bounds = array<i64: 1, 16, 48>}, {pipeline_mode = #tpu.pipeline_mode<synchronous>, transform_indices = @transform_1, window_bounds = array<i64: 48, 128>}, {pipeline_mode = #tpu.pipeline_mode<synchronous>, transform_indices = @transform_2, window_bounds = array<i64: 17, 128>}, {transform_indices = @transform_3, window_bounds = array<i64: 1, 17, 128>}]} {
    %c0 = arith.constant 0 : index
    %c0_0 = arith.constant 0 : index
    %0 = vector.load %arg2[%c0, %c0_0] : memref<48x128xbf16, #tpu.memory_space<vmem>>, vector<48x128xbf16>
    %c0_1 = arith.constant 0 : index
    %c0_2 = arith.constant 0 : index
    %c0_3 = arith.constant 0 : index
    %1 = vector.load %arg1[%c0_1, %c0_2, %c0_3] : memref<1x16x48xbf16, #tpu.memory_space<vmem>>, vector<1x16x48xbf16>
    %2 = vector.shape_cast %1 : vector<1x16x48xbf16> to vector<16x48xbf16>
    %cst = arith.constant dense<0.000000e+00> : vector<16x128xf32>
    %3 = tpu.matmul %2, %0, %cst {dimension_numbers = #tpu.dot_dimension_numbers<[1], [0], [0], [1], [0, 0, 1, 1], [], []>} : vector<16x48xbf16>, vector<48x128xbf16>, vector<16x128xf32> -> vector<16x128xf32>
    %4 = vector.shape_cast %3 : vector<16x128xf32> to vector<1x16x128xf32>
    %c0_4 = arith.constant 0 : index
    %c0_5 = arith.constant 0 : index
    %5 = vector.load %arg3[%c0_4, %c0_5] : memref<17x128xf32, #tpu.memory_space<vmem>>, vector<17x128xf32>
    %6 = vector.extract_strided_slice %5 {offsets = [0, 0], sizes = [1, 128], strides = [1, 1]} : vector<17x128xf32> to vector<1x128xf32>
    %7 = vector.shape_cast %6 : vector<1x128xf32> to vector<1x1x128xf32>
    %c0_6 = arith.constant 0 : index
    %c0_7 = arith.constant 0 : index
    %c0_8 = arith.constant 0 : index
    %8 = vector.load %arg4[%c0_6, %c0_7, %c0_8] : memref<1x17x128xf32, #tpu.memory_space<vmem>>, vector<1x1x128xf32>
    tpu.vector_store %arg4[%c0_6, %c0_7, %c0_8], %7 {strides = array<i32>} : memref<1x17x128xf32, #tpu.memory_space<vmem>>, vector<1x1x128xf32>,
    %9 = vector.extract_strided_slice %5 {offsets = [1, 0], sizes = [16, 128], strides = [1, 1]} : vector<17x128xf32> to vector<16x128xf32>
    %10 = vector.shape_cast %9 : vector<16x128xf32> to vector<1x16x128xf32>
    %11 = arith.addf %4, %10 : vector<1x16x128xf32>
    %c0_9 = arith.constant 0 : index
    %c1 = arith.constant 1 : index
    %c0_10 = arith.constant 0 : index
    %12 = vector.load %arg4[%c0_9, %c1, %c0_10] : memref<1x17x128xf32, #tpu.memory_space<vmem>>, vector<1x16x128xf32>
    tpu.vector_store %arg4[%c0_9, %c1, %c0_10], %11 {strides = array<i32>} : memref<1x17x128xf32, #tpu.memory_space<vmem>>, vector<1x16x128xf32>,
    return
  }
  func.func @transform_0(%arg0: i32) -> (i32, i32, i32) {
    %c0_i32 = arith.constant 0 : i32
    %c0_i32_0 = arith.constant 0 : i32
    %c0_i32_1 = arith.constant 0 : i32
    return %arg0, %c0_i32, %c0_i32_0 : i32, i32, i32
  }
  func.func @transform_1(%arg0: i32) -> (i32, i32) {
    %c0_i32 = arith.constant 0 : i32
    %c0_i32_0 = arith.constant 0 : i32
    %c0_i32_1 = arith.constant 0 : i32
    return %c0_i32, %c0_i32_0 : i32, i32
  }
  func.func @transform_2(%arg0: i32) -> (i32, i32) {
    %c0_i32 = arith.constant 0 : i32
    %c0_i32_0 = arith.constant 0 : i32
    %c0_i32_1 = arith.constant 0 : i32
    return %c0_i32, %c0_i32_0 : i32, i32
  }
  func.func @transform_3(%arg0: i32) -> (i32, i32, i32) {
    %c0_i32 = arith.constant 0 : i32
    %c0_i32_0 = arith.constant 0 : i32
    %c0_i32_1 = arith.constant 0 : i32
    return %arg0, %c0_i32, %c0_i32_0 : i32, i32, i32
  }
}

</mosaic_0001>

<llo_original>
// kernel: tpu_custom_call.1
$region0: #{tpu_custom_call.1}
  #allocation0 [shape = 'u32[]', space=smem, size = 0x4, offset = 0x4, fixed_abs, tag = 'smem constant byte address 0x4 - core index']
  #allocation1 [shape = 'u32[144,128]{1,0:T(1,128)}', space=vmem, size = 0x12000, scoped, tag = 'internal scratch']
  %s0 = inlined_call_operand.hbm [shape: bf16[2,16,48], index: 0, kind: input, shape index: {}]
  %s1 = inlined_call_operand.hbm [shape: bf16[48,128], index: 1, kind: input, shape index: {}]
  %s2 = inlined_call_operand.hbm [shape: f32[17,128], index: 2, kind: input, shape index: {}]
  %s3 = inlined_call_operand.vmem [shape: f32[2,17,128], index: 3, kind: output, shape index: {}]
  %s4 = sld [smem:[#allocation0]]
  $region57: #{tpu_custom_call.1} parent=0
    _
  %s6 = ssub.s32 1, %s4
  %s7 = scalar_select 0, %s6, %s4
  $region1: #{tpu_custom_call.1} parent=0
    #allocation2 [shape = 'u8[8192]{0}', space=vmem, size = 0x2000, scoped, tag = 'input window, operand 0']
    #allocation3 [shape = 's32[2]{0}', space=sflag, size = 0x8, scoped, tag = 'scoped memory for tpu_custom_call.1']
    #allocation4 [shape = 'u8[12288]{0}', space=vmem, size = 0x3000, scoped, tag = 'input window, operand 1, single buffered']
    #allocation5 [shape = 's32[1]{0}', space=sflag, size = 0x4, scoped, tag = 'scoped memory for tpu_custom_call.1']
    #allocation6 [shape = 'u8[12288]{0}', space=vmem, size = 0x3000, scoped, tag = 'input window, operand 2, single buffered']
    %8 = vsyncpa [#allocation3], 0
    %s9 = scalar_lea.sflag [#allocation3], 1
    %10 = vsyncpa %s9, 0
    %11 = vsyncpa [#allocation5], 0
    loop: start=0, step=1, limit=4
    $region2: #{tpu_custom_call.1} parent=1 // loop_pre_header
      _
    $region3: #{tpu_custom_call.1} parent=1 // loop_header
      %s13 = sphi 0, %s17
      %p14 = scmp.ge.s32.totalorder %s13, 4
      %s23 = sphi 0, %s25
      %s26 = sphi 0, %s23
      %s27 = sphi 0, %s26
      %s43 = sphi 0, %s27
      %s47 = sphi 0, %s47
      %s49 = sphi 0, %s47
      %s50 = sphi 0, %s49
      %s64 = sphi 0, %s50
      %s68 = sphi 0, %s68
      %s70 = sphi 0, %s68
      %s71 = sphi 0, %s70
      %s85 = sphi 0, %s71
      %s91 = sphi 0, %s93
      %s94 = sphi 0, %s91
      %s95 = sphi 0, %s94
      %s111 = sphi 0, %s95
    $region4: #{tpu_custom_call.1} parent=1 // loop_header_branch
      %16 = sbr.rel (%p14) target = $region8
    $region5: #{tpu_custom_call.1} parent=1 // loop_body
      %s18 = ssub.s32 %s13, 1
      %s19 = ssub.s32 %s13, 2
      %s20 = sadd.s32 %s13, 1
      %s21 = ssub.s32 %s13, %s20
      %p22 = scmp.eq.s32.totalorder %s21, 0
      %s24 = sadd.s32 %s23, 1
      %s25 = scalar_select %p22, %s23, %s24
      %p28 = pneg %p22
      %p29 = scmp.eq.s32.totalorder %s13, 1
      %p30 = por %p28, %p29
      %p31 = scmp.ne.s32.totalorder %s23, %s26
      %p32 = scmp.eq.s32.totalorder %s13, 0
      %p33 = por %p31, %p32
      %p34 = scmp.ne.s32.totalorder %s23, %s26
      %p35 = scmp.eq.s32.totalorder %s18, 1
      %p36 = por %p34, %p35
      %p37 = scmp.ne.s32.totalorder %s26, %s27
      %p38 = scmp.eq.s32.totalorder %s18, 0
      %p39 = por %p37, %p38
      %p40 = scmp.ne.s32.totalorder %s26, %s27
      %p41 = scmp.eq.s32.totalorder %s19, 1
      %p42 = por %p40, %p41
      %p44 = scmp.ne.s32.totalorder %s27, %s43
      %p45 = scmp.eq.s32.totalorder %s19, 0
      %p46 = por %p44, %p45
      %s48 = sadd.s32 %s47, 1
      %p51 = scmp.eq.s32.totalorder %s13, 1
      %p52 = scmp.ne.s32.totalorder %s47, %s49
      %p53 = scmp.eq.s32.totalorder %s13, 0
      %p54 = por %p52, %p53
      %p55 = scmp.ne.s32.totalorder %s47, %s49
      %p56 = scmp.eq.s32.totalorder %s18, 1
      %p57 = por %p55, %p56
      %p58 = scmp.ne.s32.totalorder %s49, %s50
      %p59 = scmp.eq.s32.totalorder %s18, 0
      %p60 = por %p58, %p59
      %p61 = scmp.ne.s32.totalorder %s49, %s50
      %p62 = scmp.eq.s32.totalorder %s19, 1
      %p63 = por %p61, %p62
      %p65 = scmp.ne.s32.totalorder %s50, %s64
      %p66 = scmp.eq.s32.totalorder %s19, 0
      %p67 = por %p65, %p66
      %s69 = sadd.s32 %s68, 1
      %p72 = scmp.eq.s32.totalorder %s13, 1
      %p73 = scmp.ne.s32.totalorder %s68, %s70
      %p74 = scmp.eq.s32.totalorder %s13, 0
      %p75 = por %p73, %p74
      %p76 = scmp.ne.s32.totalorder %s68, %s70
      %p77 = scmp.eq.s32.totalorder %s18, 1
      %p78 = por %p76, %p77
      %p79 = scmp.ne.s32.totalorder %s70, %s71
      %p80 = scmp.eq.s32.totalorder %s18, 0
      %p81 = por %p79, %p80
      %p82 = scmp.ne.s32.totalorder %s70, %s71
      %p83 = scmp.eq.s32.totalorder %s19, 1
      %p84 = por %p82, %p83
      %p86 = scmp.ne.s32.totalorder %s71, %s85
      %p87 = scmp.eq.s32.totalorder %s19, 0
      %p88 = por %p86, %p87
      %s89 = ssub.s32 %s13, %s20
      %p90 = scmp.eq.s32.totalorder %s89, 0
      %s92 = sadd.s32 %s91, 1
      %s93 = scalar_select %p90, %s91, %s92
      %p96 = pneg %p90
      %p97 = scmp.eq.s32.totalorder %s13, 1
      %p98 = por %p96, %p97
      %p99 = scmp.ne.s32.totalorder %s91, %s94
      %p100 = scmp.eq.s32.totalorder %s13, 0
      %p101 = por %p99, %p100
      %p102 = scmp.ne.s32.totalorder %s91, %s94
      %p103 = scmp.eq.s32.totalorder %s18, 1
      %p104 = por %p102, %p103
      %p105 = scmp.ne.s32.totalorder %s94, %s95
      %p106 = scmp.eq.s32.totalorder %s18, 0
      %p107 = por %p105, %p106
      %p108 = scmp.ne.s32.totalorder %s94, %s95
      %p109 = scmp.eq.s32.totalorder %s19, 1
      %p110 = por %p108, %p109
      %p112 = scmp.ne.s32.totalorder %s95, %s111
      %p113 = scmp.eq.s32.totalorder %s19, 0
      %p114 = por %p112, %p113
      %p115 = scmp.le.s32.totalorder 1, %s13
      %p116 = scmp.lt.s32.totalorder %s13, 3
      %p117 = pnand %p115, %p116
      %p118 = pneg %p117
      // Predicated region
      $region9: #{tpu_custom_call.1} parent=5 // pred_check
        _
      $region10: #{tpu_custom_call.1} parent=5 // pred_check_branch
        %120 = sbr.rel (%p117) target = $region12
      $region11: #{tpu_custom_call.1} parent=5 // pred_region
        %s121 = ssub.s32 %s13, 1
        // Predicated region
        $region13: #{tpu_custom_call.1} parent=11 // pred_check
          %p122 = pneg %p60
        $region14: #{tpu_custom_call.1} parent=11 // pred_check_branch
          %124 = sbr.rel (%p122) target = $region16
        $region15: #{tpu_custom_call.1} parent=11 // pred_region
          %s126 = ssub.s32 384, 384
          %127 = vsyncadd [#allocation5], %s126
          %s128 = sshll.u32 [#allocation4], 4
          %s129 = int_to_ptr.vmem [resolvable:$true] %s128
          %134 = dma.hbm_to_vmem [thread:$0]  %s1, 384, %s129, [#allocation5], 64, 64, 4
        $region16: #{tpu_custom_call.1} parent=11 // pred_fallthru
          _
        // Predicated region
        $region17: #{tpu_custom_call.1} parent=11 // pred_check
          %p135 = pneg %p81
        $region18: #{tpu_custom_call.1} parent=11 // pred_check_branch
          %137 = sbr.rel (%p135) target = $region20
        $region19: #{tpu_custom_call.1} parent=11 // pred_region
          %s139 = ssub.s32 384, 384
          %140 = vsyncadd [#allocation5], %s139
          %s141 = sshll.u32 [#allocation6], 4
          %s142 = int_to_ptr.vmem [resolvable:$true] %s141
          %147 = dma.hbm_to_vmem [thread:$0]  %s2, 384, %s142, [#allocation5], 128, 128, 8
        $region20: #{tpu_custom_call.1} parent=11 // pred_fallthru
          _
      $region12: #{tpu_custom_call.1} parent=5 // pred_fallthru
        _
      %p148 = scmp.lt.s32.totalorder %s13, 2
      // Predicated region
      $region21: #{tpu_custom_call.1} parent=5 // pred_check
        %p149 = pneg %p148
      $region22: #{tpu_custom_call.1} parent=5 // pred_check_branch
        %151 = sbr.rel (%p149) target = $region24
      $region23: #{tpu_custom_call.1} parent=5 // pred_region
        // Predicated region
        $region25: #{tpu_custom_call.1} parent=23 // pred_check
          %p152 = pneg %p33
        $region26: #{tpu_custom_call.1} parent=23 // pred_check_branch
          %154 = sbr.rel (%p152) target = $region28
        $region27: #{tpu_custom_call.1} parent=23 // pred_region
          %s155 = sand.u32 %s23, 1
          %s156 = scalar_lea.sflag [#allocation3], %s155
          %s157 = sand.u32 %s23, 1
          %s158 = smul.addr %s157, 8
          %s159 = scalar_lea.vmem [#allocation2], %s158
          %s161 = ssub.s32 128, 128
          %162 = vsyncadd %s156, %s161
          %s163 = smul.addr %s13, 2
          %s164 = smul.addr %s163, 64
          %s165 = scalar_lea.hbm %s0, %s164
          %s166 = sshll.u32 %s159, 4
          %s167 = int_to_ptr.vmem [resolvable:$true] %s166
          %172 = dma.hbm_to_vmem [thread:$0]  %s165, 128, %s167, %s156, 64, 64, 4
        $region28: #{tpu_custom_call.1} parent=23 // pred_fallthru
          _
      $region24: #{tpu_custom_call.1} parent=5 // pred_fallthru
        _
      %p173 = scmp.le.s32.totalorder 1, %s13
      %p174 = scmp.lt.s32.totalorder %s13, 3
      %p175 = pnand %p173, %p174
      %p176 = pneg %p175
      // Predicated region
      $region29: #{tpu_custom_call.1} parent=5 // pred_check
        _
      $region30: #{tpu_custom_call.1} parent=5 // pred_check_branch
        %178 = sbr.rel (%p175) target = $region32
      $region31: #{tpu_custom_call.1} parent=5 // pred_region
        %s179 = ssub.s32 %s13, 1
        %s180 = sand.u32 %s26, 1
        %s181 = scalar_lea.sflag [#allocation3], %s180
        %s182 = sand.u32 %s26, 1
        %s183 = smul.addr %s182, 8
        %s184 = scalar_lea.vmem [#allocation2], %s183
        // Predicated region
        $region33: #{tpu_custom_call.1} parent=31 // pred_check
          %p185 = pneg %p39
        $region34: #{tpu_custom_call.1} parent=31 // pred_check_branch
          %187 = sbr.rel (%p185) target = $region36
        $region35: #{tpu_custom_call.1} parent=31 // pred_region
          %188 = dma.done %s181, 128
        $region36: #{tpu_custom_call.1} parent=31 // pred_fallthru
          _
        // Predicated region
        $region37: #{tpu_custom_call.1} parent=31 // pred_check
          %p189 = pneg %p60
        $region38: #{tpu_custom_call.1} parent=31 // pred_check_branch
          %191 = sbr.rel (%p189) target = $region40
        $region39: #{tpu_custom_call.1} parent=31 // pred_region
          %192 = dma.done [#allocation5], 384
        $region40: #{tpu_custom_call.1} parent=31 // pred_fallthru
          _
        // Predicated region
        $region41: #{tpu_custom_call.1} parent=31 // pred_check
          %p193 = pneg %p81
        $region42: #{tpu_custom_call.1} parent=31 // pred_check_branch
          %195 = sbr.rel (%p193) target = $region44
        $region43: #{tpu_custom_call.1} parent=31 // pred_region
          %196 = dma.done [#allocation5], 384
        $region44: #{tpu_custom_call.1} parent=31 // pred_fallthru
          _
        %s197 = sand.u32 %s26, 1
        %s198 = scalar_lea.sflag [#allocation3], %s197
        %s199 = sand.u32 %s26, 1
        %s200 = smul.addr %s199, 8
        %s201 = scalar_lea.vmem [#allocation2], %s200
        %p202 = pneg %p39
        %p203 = pneg %p36
        %p204 = pneg %p60
        %p205 = pneg %p57
        %p206 = pneg %p81
        %p207 = pneg %p78
        %p208 = pneg %p107
        %p209 = pneg %p104
        %p210 = scmp.lt.s32.totalorder %s18, 1
        %s211 = scalar_select %p210, %s18, 1
        %s212 = smul.addr %s211, 3
        %s213 = smul.addr %s212, 8
        %s214 = scalar_lea.vmem %s3, %s213
        %p215 = scmp.lt.s32.totalorder %s18, 1
        %s216 = scalar_select %p215, %s18, 1
        %s217 = smul.addr %s216, 3
        %s218 = smul.addr %s217, 8
        %s219 = scalar_lea.vmem %s3, %s218
        %v221 = vld [vmem:[#allocation4] sm:$0xf]
        %v222 = vld [vmem:[#allocation4 + $0x4] sm:$0xf]
        %v223 = vld [vmem:[#allocation4 + $0x8] sm:$0xf]
        %v224 = vld [vmem:[#allocation4 + $0xc] sm:$0xf]
        %v225 = vld [vmem:[#allocation4 + $0x10] sm:$0xf]
        %v226 = vld [vmem:[#allocation4 + $0x14] sm:$0xf]
        %v227 = vld [vmem:[%s184] sm:$0xf]
        %v228 = vld [vmem:[%s184 + $0x4] sm:$0xf]
        %v231 = vunpack.c.l.b16 %v227
        %v232 = vunpack.c.l.b16 %v228
        %v233 = vpack.c.b16 %v232, %v231
        %v240 = vunpack.c.l.b16 %v221
        %v241 = vunpack.c.l.b16 %v222
        %v242 = vunpack.c.l.b16 %v223
        %v243 = vunpack.c.l.b16 %v224
        %v244 = vunpack.c.l.b16 %v225
        %v245 = vunpack.c.l.b16 %v226
        %v246 = vpack.c.b16 %v241, %v240
        %v247 = vpack.c.b16 %v243, %v242
        %v248 = vpack.c.b16 %v245, %v244
        %vm252 = vcmask 392192
        %v254 = vsel %vm252, %v233, 0
        %256 = vmatprep.subr.bf16.mxu0 0
        %257 = vmatpush1.bf16.msra.mxu0 0
        %258 = vmatprep.subr.bf16.mxu0 0
        %259 = vmatpush1.bf16.msra.mxu0 0
        %260 = vmatprep.subr.bf16.mxu0 0
        %261 = vmatpush1.bf16.msra.mxu0 0
        %262 = vmatprep.subr.bf16.mxu0 0
        %263 = vmatpush1.bf16.msra.mxu0 0
        %264 = vmatprep.subr.bf16.mxu0 0
        %265 = vmatpush1.bf16.msra.mxu0 0
        %266 = vmatprep.subr.bf16.mxu0 0
        %267 = vmatpush1.bf16.msra.mxu0 %v248
        %268 = vmatprep.subr.bf16.mxu0 0
        %269 = vmatpush1.bf16.msra.mxu0 %v247
        %270 = vmatprep.subr.bf16.mxu0 0
        %271 = vmatpush1.bf16.msra.mxu0 %v246
        %272 = vmatprep.subr.bf16.mxu0 0
        %273 = vmatpush2.bf16.msra.mxu0 0
        %274 = vmatprep.subr.bf16.mxu0 0
        %275 = vmatpush2.bf16.msra.mxu0 0
        %276 = vmatprep.subr.bf16.mxu0 0
        %277 = vmatpush2.bf16.msra.mxu0 0
        %278 = vmatprep.subr.bf16.mxu0 0
        %279 = vmatpush2.bf16.msra.mxu0 0
        %280 = vmatprep.subr.bf16.mxu0 0
        %281 = vmatpush2.bf16.msra.mxu0 0
        %282 = vmatprep.subr.bf16.mxu0 0
        %283 = vmatpush2.bf16.msra.mxu0 0
        %284 = vmatprep.subr.bf16.mxu0 0
        %285 = vmatpush2.bf16.msra.mxu0 0
        %286 = vmatprep.subr.bf16.mxu0 0
        %287 = vmatpush2.bf16.msra.mxu0 0
        %288 = vmatprep.mubr.bf16.mxu0 0
        %289 = vmatmul.mubr.bf16.gmra.mxu0 %v254
        %v290 = vpop.f32.mrf.mxu0
        %v291 = vadd.f32 0.0, %v290
        %v292 = vpop.f32.mrf.mxu0
        %v293 = vpop.f32.mrf.mxu0
        %v294 = vadd.f32 0.0, %v293
        %v295 = vpop.f32.mrf.mxu0
        %296 = vdwg.mxu0
        %v297 = vld [vmem:[#allocation6] sm:$0xff]
        %v298 = vld [vmem:[#allocation6 + $0x8] sm:$0xff]
        %v299 = vld [vmem:[#allocation6 + $0x10] sm:$0x1]
        %300 = vst [vmem:[%s219] sm:$0x1] %v297
        %vm304 = vcmask 1046528
        %v305 = vrot.slane %v297, 1
        %v306 = vrot.slane %v298, 1
        %v307 = vsel %vm304, %v305, %v306
        %v308 = vrot.slane %v299, 1
        %v309 = vsel %vm304, %v306, %v308
        %v312 = vadd.f32 %v291, %v307
        %v313 = vadd.f32 %v294, %v309
        %314 = vst [vmem:[%s219 + $0x1] sm:$0xff] %v312
        %315 = vst [vmem:[%s219 + $0x9] sm:$0xff] %v313
        %p316 = scmp.lt.s32.totalorder %s18, 1
        %s317 = scalar_select %p316, %s18, 1
        %s318 = smul.addr %s317, 3
        %s319 = smul.addr %s318, 8
        %s320 = scalar_lea.vmem %s3, %s319
        // Predicated region
        $region45: #{tpu_custom_call.1} parent=31 // pred_check
          %p321 = pneg %p104
        $region46: #{tpu_custom_call.1} parent=31 // pred_check_branch
          %323 = sbr.rel (%p321) target = $region48
        $region47: #{tpu_custom_call.1} parent=31 // pred_region
          _
        $region48: #{tpu_custom_call.1} parent=31 // pred_fallthru
          _
      $region32: #{tpu_custom_call.1} parent=5 // pred_fallthru
        _
      %p324 = scmp.le.s32.totalorder 2, %s13
      // Predicated region
      $region49: #{tpu_custom_call.1} parent=5 // pred_check
        %p325 = pneg %p324
      $region50: #{tpu_custom_call.1} parent=5 // pred_check_branch
        %327 = sbr.rel (%p325) target = $region52
      $region51: #{tpu_custom_call.1} parent=5 // pred_region
        %s328 = ssub.s32 %s13, 2
        // Predicated region
        $region53: #{tpu_custom_call.1} parent=51 // pred_check
          %p329 = pneg %p110
        $region54: #{tpu_custom_call.1} parent=51 // pred_check_branch
          %331 = sbr.rel (%p329) target = $region56
        $region55: #{tpu_custom_call.1} parent=51 // pred_region
          %p332 = scmp.lt.s32.totalorder %s19, 1
          %s333 = scalar_select %p332, %s19, 1
          %s334 = smul.addr %s333, 3
          %s335 = smul.addr %s334, 8
          %s336 = scalar_lea.vmem %s3, %s335
        $region56: #{tpu_custom_call.1} parent=51 // pred_fallthru
          _
      $region52: #{tpu_custom_call.1} parent=5 // pred_fallthru
        _
    $region6: #{tpu_custom_call.1} parent=1 // loop_footer
      %s17 = sadd.s32 1, %s13
    $region7: #{tpu_custom_call.1} parent=1 // loop_footer_branch
      %12 = sbr.rel target = $region3
    $region8: #{tpu_custom_call.1} parent=1 // loop_exit
      _
    %337 = vsyncpa [#allocation3], 1
    %s338 = scalar_lea.sflag [#allocation3], 1
    %339 = vsyncpa %s338, 1
    %340 = vsyncpa [#allocation5], 1

</llo_original>
